<compile_context>
chip_gen: v6e
topology: v6e:2x2x1
jax: 0.10.0
libtpu: 0.0.40
codegen_flags: <defaults>
</compile_context>

<pallas_src>
import jax
import jax.numpy as jnp
from jax import lax
from jax.experimental import pallas as pl
from jax.experimental.pallas import tpu as pltpu

BN_EPS = 1e-5


def mlp_kernel(x_ref, w1_ref, gamma_ref, beta_ref, w2_ref, b2_ref, o_ref, acc_ref):
    k = pl.program_id(0)

    @pl.when(k == 0)
    def _init():
        acc_ref[...] = jnp.zeros_like(acc_ref)

    # ---- Linear 1 (no bias): bf16 inputs, f32 accumulation on the MXU ----
    h = jnp.dot(x_ref[...], w1_ref[...],
                preferred_element_type=jnp.float32)          # (B, tH) f32

    # ---- BatchNorm1d (training mode, biased batch stats), folded affine ----
    inv_b = 1.0 / h.shape[0]
    mean = jnp.sum(h, axis=0, keepdims=True) * inv_b         # (1, tH) f32
    mean_sq = jnp.sum(h * h, axis=0, keepdims=True) * inv_b  # (1, tH) f32
    var = jnp.maximum(mean_sq - mean * mean, 0.0)            # guard cancellation
    s = gamma_ref[...] * lax.rsqrt(var + BN_EPS)             # (1, tH)
    t = beta_ref[...] - mean * s                             # (1, tH)

    # ---- ReLU (single FMA epilogue, f32) ----
    h_act = jnp.maximum(h * s + t, 0.0)                      # (B, tH) f32

    # ---- Linear 2 partial product, accumulated in f32 scratch ----
    acc_ref[...] += jnp.dot(h_act.astype(w2_ref.dtype), w2_ref[...],
                            preferred_element_type=jnp.float32)

    @pl.when(k == pl.num_programs(0) - 1)
    def _finalize():
        o_ref[...] = (acc_ref[...] + b2_ref[...]).astype(o_ref.dtype)


def _pick_tile_h(H):
    for cand in (1024, 512, 256, 128):
        if H % cand == 0:
            return cand
    return H  # small H: one full-width tile (full-dim block is always legal)


def mlp_forward(x, w1, gamma, beta, w2, b2, *, tile_h=None):
    """x:(B,D_in)  w1:(D_in,H)  gamma/beta:(1,H) or (H,)  w2:(H,D_out)  b2:(1,D_out) or (D_out,)"""
    B, D_in = x.shape
    H = w1.shape[1]
    D_out = w2.shape[1]

    # --- hidden-axis tile ---
    tH = _pick_tile_h(H) if tile_h is None else tile_h
    assert H % tH == 0 and (tH % 128 == 0 or tH == H), (H, tH)
    n_h = H // tH

    # --- lane-dense output: pad D_out up to a multiple of 128 ---
    D_out_p = max(128, ((D_out + 127) // 128) * 128)
    w2f = jnp.asarray(w2, jnp.float32)
    b2f = jnp.asarray(b2, jnp.float32).reshape(1, D_out)
    if D_out_p != D_out:
        w2f = jnp.pad(w2f, ((0, 0), (0, D_out_p - D_out)))
        b2f = jnp.pad(b2f, ((0, 0), (0, D_out_p - D_out)))

    # --- bf16 matmul operands, f32 everything else ---
    xb = x.astype(jnp.bfloat16)
    w1b = jnp.asarray(w1).astype(jnp.bfloat16)
    w2b = w2f.astype(jnp.bfloat16)
    gammaf = jnp.asarray(gamma, jnp.float32).reshape(1, H)
    betaf = jnp.asarray(beta, jnp.float32).reshape(1, H)

    # --- derive VMEM budget from the block shapes (x2 for double buffering) ---
    def nbytes(shape, dtype):
        n = 1
        for d in shape:
            n *= d
        return n * jnp.dtype(dtype).itemsize

    vmem = 2 * (nbytes((B, D_in), jnp.bfloat16)
                + nbytes((D_in, tH), jnp.bfloat16)
                + 2 * nbytes((1, tH), jnp.float32)
                + nbytes((tH, D_out_p), jnp.bfloat16)
                + nbytes((1, D_out_p), jnp.float32)
                + nbytes((B, D_out_p), jnp.float32))
    vmem += nbytes((B, D_out_p), jnp.float32)          # scratch accumulator
    vmem_limit = max(int(vmem * 1.5) + (2 << 20), 16 << 20)
    vmem_limit = min(vmem_limit, 64 << 20)             # stay within v7x physical VMEM

    out = pl.pallas_call(
        mlp_kernel,
        out_shape=jax.ShapeDtypeStruct((B, D_out_p), jnp.float32),
        grid_spec=pltpu.PrefetchScalarGridSpec(
            num_scalar_prefetch=0,
            grid=(n_h,),
            in_specs=[
                pl.BlockSpec((B, D_in), lambda k: (0, 0)),        # x (resident)
                pl.BlockSpec((D_in, tH), lambda k: (0, k)),       # w1 column tile
                pl.BlockSpec((1, tH), lambda k: (0, k)),          # gamma tile
                pl.BlockSpec((1, tH), lambda k: (0, k)),          # beta tile
                pl.BlockSpec((tH, D_out_p), lambda k: (k, 0)),    # w2 row tile
                pl.BlockSpec((1, D_out_p), lambda k: (0, 0)),     # b2 (resident)
            ],
            out_specs=pl.BlockSpec((B, D_out_p), lambda k: (0, 0)),
            scratch_shapes=[pltpu.VMEM((B, D_out_p), jnp.float32)],
        ),
        compiler_params=pltpu.CompilerParams(
            dimension_semantics=("arbitrary",),
            vmem_limit_bytes=vmem_limit,
        ),
    )(xb, w1b, gammaf, betaf, w2b, b2f)

    return out[:, :D_out]


def reference_forward(x, w1, gamma, beta, w2, b2):
    """Pure-JAX reference mirroring the kernel's bf16-input / f32-accumulate numerics."""
    xb = x.astype(jnp.bfloat16)
    w1b = jnp.asarray(w1).astype(jnp.bfloat16)
    w2b = jnp.asarray(w2).astype(jnp.bfloat16)
    h = jnp.dot(xb, w1b, preferred_element_type=jnp.float32)
    mean = jnp.mean(h, axis=0, keepdims=True)
    var = jnp.mean((h - mean) ** 2, axis=0, keepdims=True)
    h = (h - mean) * lax.rsqrt(var + BN_EPS) * jnp.reshape(gamma, (1, -1)) \
        + jnp.reshape(beta, (1, -1))
    h = jnp.maximum(h, 0.0)
    return jnp.dot(h.astype(jnp.bfloat16), w2b,
                   preferred_element_type=jnp.float32) + jnp.reshape(b2, (1, -1))


if __name__ == "__main__":
    # Small shapes consistent with the module (input_dim=2048, hidden=4096,
    # output_dim=256 scaled down). tile_h=128 forces a 2-step grid so the
    # accumulator / pl.when paths are exercised even at toy sizes.
    B, D_IN, HIDDEN, D_OUT = 8, 32, 256, 16

    key = jax.random.PRNGKey(0)
    kx, kw1, kw2, kb2 = jax.random.split(key, 4)

    x = jax.random.normal(kx, (B, D_IN), dtype=jnp.float32)

    # Parameters stored as (in, out) so the kernel computes x @ W.
    w1 = jax.random.normal(kw1, (D_IN, HIDDEN), dtype=jnp.float32) * (1.0 / D_IN ** 0.5)
    gamma = jnp.ones((1, HIDDEN), dtype=jnp.float32)   # BatchNorm1d weight
    beta = jnp.zeros((1, HIDDEN), dtype=jnp.float32)   # BatchNorm1d bias
    w2 = jax.random.normal(kw2, (HIDDEN, D_OUT), dtype=jnp.float32) * (1.0 / HIDDEN ** 0.5)
    b2 = jax.random.normal(kb2, (1, D_OUT), dtype=jnp.float32) * 0.01

    out = mlp_forward(x, w1, gamma, beta, w2, b2, tile_h=128)
    out = jax.block_until_ready(out)

    ref = reference_forward(x, w1, gamma, beta, w2, b2)
    assert out.shape == (B, D_OUT), out.shape
    assert jnp.allclose(out, ref, atol=1e-2, rtol=1e-2), \
        f"mismatch vs reference: max abs err {jnp.max(jnp.abs(out - ref))}"

    print("KERNEL_OK")
</pallas_src>

<mosaic_0001>
module attributes {stable_mosaic.version = 11 : i64} {
  func.func @mlp_kernel(%arg0: i32, %arg1: memref<8x32xbf16, #tpu.memory_space<vmem>>, %arg2: memref<32x128xbf16, #tpu.memory_space<vmem>>, %arg3: memref<1x128xf32, #tpu.memory_space<vmem>>, %arg4: memref<1x128xf32, #tpu.memory_space<vmem>>, %arg5: memref<128x128xbf16, #tpu.memory_space<vmem>>, %arg6: memref<1x128xf32, #tpu.memory_space<vmem>>, %arg7: memref<8x128xf32, #tpu.memory_space<vmem>>, %arg8: memref<8x128xf32, #tpu.memory_space<vmem>>) attributes {dimension_semantics = [#tpu.dimension_semantics<arbitrary>], iteration_bounds = array<i64: 2>, scalar_prefetch = 0 : i64, scratch_operands = 1 : i64, tpu.core_type = #tpu.core_type<tc>, window_params = [{pipeline_mode = #tpu.pipeline_mode<synchronous>, transform_indices = @transform_0, window_bounds = array<i64: 8, 32>}, {transform_indices = @transform_1, window_bounds = array<i64: 32, 128>}, {transform_indices = @transform_2, window_bounds = array<i64: 1, 128>}, {transform_indices = @transform_3, window_bounds = array<i64: 1, 128>}, {transform_indices = @transform_4, window_bounds = array<i64: 128, 128>}, {pipeline_mode = #tpu.pipeline_mode<synchronous>, transform_indices = @transform_5, window_bounds = array<i64: 1, 128>}, {pipeline_mode = #tpu.pipeline_mode<synchronous>, transform_indices = @transform_6, window_bounds = array<i64: 8, 128>}]} {
    %c0_i32 = arith.constant 0 : i32
    %0 = arith.cmpi eq, %arg0, %c0_i32 : i32
    %1 = arith.extui %0 : i1 to i32
    %c0_i32_0 = arith.constant 0 : i32
    %2 = arith.cmpi ne, %1, %c0_i32_0 : i32
    scf.if %2 {
      %cst_23 = arith.constant 0.000000e+00 : f32
      %42 = vector.broadcast %cst_23 : f32 to vector<8x128xf32>
      %c0_24 = arith.constant 0 : index
      %c0_25 = arith.constant 0 : index
      %43 = vector.load %arg8[%c0_24, %c0_25] : memref<8x128xf32, #tpu.memory_space<vmem>>, vector<8x128xf32>
      tpu.vector_store %arg8[%c0_24, %c0_25], %42 {strides = array<i32>} : memref<8x128xf32, #tpu.memory_space<vmem>>, vector<8x128xf32>,
    } else {
    }
    %c0 = arith.constant 0 : index
    %c0_1 = arith.constant 0 : index
    %3 = vector.load %arg1[%c0, %c0_1] : memref<8x32xbf16, #tpu.memory_space<vmem>>, vector<8x32xbf16>
    %c0_2 = arith.constant 0 : index
    %c0_3 = arith.constant 0 : index
    %4 = vector.load %arg2[%c0_2, %c0_3] : memref<32x128xbf16, #tpu.memory_space<vmem>>, vector<32x128xbf16>
    %cst = arith.constant dense<0.000000e+00> : vector<8x128xf32>
    %5 = tpu.matmul %3, %4, %cst {dimension_numbers = #tpu.dot_dimension_numbers<[1], [0], [0], [1], [0, 0, 1, 1], [], []>} : vector<8x32xbf16>, vector<32x128xbf16>, vector<8x128xf32> -> vector<8x128xf32>
    %cst_4 = arith.constant dense<0.000000e+00> : vector<128xf32>
    %6 = vector.multi_reduction <add>, %5, %cst_4 [0] : vector<8x128xf32> to vector<128xf32>
    %7 = vector.shape_cast %6 : vector<128xf32> to vector<1x128xf32>
    %cst_5 = arith.constant 1.250000e-01 : f32
    %8 = vector.broadcast %cst_5 : f32 to vector<1x128xf32>
    %9 = arith.mulf %7, %8 : vector<1x128xf32>
    %10 = arith.mulf %5, %5 : vector<8x128xf32>
    %cst_6 = arith.constant dense<0.000000e+00> : vector<128xf32>
    %11 = vector.multi_reduction <add>, %10, %cst_6 [0] : vector<8x128xf32> to vector<128xf32>
    %12 = vector.shape_cast %11 : vector<128xf32> to vector<1x128xf32>
    %cst_7 = arith.constant 1.250000e-01 : f32
    %13 = vector.broadcast %cst_7 : f32 to vector<1x128xf32>
    %14 = arith.mulf %12, %13 : vector<1x128xf32>
    %15 = arith.mulf %9, %9 : vector<1x128xf32>
    %16 = arith.subf %14, %15 : vector<1x128xf32>
    %cst_8 = arith.constant 0.000000e+00 : f32
    %17 = vector.broadcast %cst_8 : f32 to vector<1x128xf32>
    %18 = arith.maximumf %16, %17 : vector<1x128xf32>
    %c0_9 = arith.constant 0 : index
    %c0_10 = arith.constant 0 : index
    %19 = vector.load %arg3[%c0_9, %c0_10] : memref<1x128xf32, #tpu.memory_space<vmem>>, vector<1x128xf32>
    %cst_11 = arith.constant 9.99999974E-6 : f32
    %20 = vector.broadcast %cst_11 : f32 to vector<1x128xf32>
    %21 = arith.addf %18, %20 : vector<1x128xf32>
    %22 = math.rsqrt %21 : vector<1x128xf32>
    %23 = arith.mulf %19, %22 : vector<1x128xf32>
    %c0_12 = arith.constant 0 : index
    %c0_13 = arith.constant 0 : index
    %24 = vector.load %arg4[%c0_12, %c0_13] : memref<1x128xf32, #tpu.memory_space<vmem>>, vector<1x128xf32>
    %25 = arith.mulf %9, %23 : vector<1x128xf32>
    %26 = arith.subf %24, %25 : vector<1x128xf32>
    %27 = vector.broadcast %23 : vector<1x128xf32> to vector<8x128xf32>
    %28 = arith.mulf %5, %27 : vector<8x128xf32>
    %29 = vector.broadcast %26 : vector<1x128xf32> to vector<8x128xf32>
    %30 = arith.addf %28, %29 : vector<8x128xf32>
    %cst_14 = arith.constant 0.000000e+00 : f32
    %31 = vector.broadcast %cst_14 : f32 to vector<8x128xf32>
    %32 = arith.maximumf %30, %31 : vector<8x128xf32>
    %c0_15 = arith.constant 0 : index
    %c0_16 = arith.constant 0 : index
    %33 = vector.load %arg8[%c0_15, %c0_16] : memref<8x128xf32, #tpu.memory_space<vmem>>, vector<8x128xf32>
    %34 = arith.truncf %32 : vector<8x128xf32> to vector<8x128xbf16>
    %c0_17 = arith.constant 0 : index
    %c0_18 = arith.constant 0 : index
    %35 = vector.load %arg5[%c0_17, %c0_18] : memref<128x128xbf16, #tpu.memory_space<vmem>>, vector<128x128xbf16>
    %cst_19 = arith.constant dense<0.000000e+00> : vector<8x128xf32>
    %36 = tpu.matmul %34, %35, %cst_19 {dimension_numbers = #tpu.dot_dimension_numbers<[1], [0], [0], [1], [0, 0, 1, 1], [], []>} : vector<8x128xbf16>, vector<128x128xbf16>, vector<8x128xf32> -> vector<8x128xf32>
    %37 = arith.addf %33, %36 : vector<8x128xf32>
    %c0_20 = arith.constant 0 : index
    %c0_21 = arith.constant 0 : index
    %38 = vector.load %arg8[%c0_20, %c0_21] : memref<8x128xf32, #tpu.memory_space<vmem>>, vector<8x128xf32>
    tpu.vector_store %arg8[%c0_20, %c0_21], %37 {strides = array<i32>} : memref<8x128xf32, #tpu.memory_space<vmem>>, vector<8x128xf32>,
    %c1_i32 = arith.constant 1 : i32
    %39 = arith.cmpi eq, %arg0, %c1_i32 : i32
    %40 = arith.extui %39 : i1 to i32
    %c0_i32_22 = arith.constant 0 : i32
    %41 = arith.cmpi ne, %40, %c0_i32_22 : i32
    scf.if %41 {
      %c0_23 = arith.constant 0 : index
      %c0_24 = arith.constant 0 : index
      %42 = vector.load %arg8[%c0_23, %c0_24] : memref<8x128xf32, #tpu.memory_space<vmem>>, vector<8x128xf32>
      %c0_25 = arith.constant 0 : index
      %c0_26 = arith.constant 0 : index
      %43 = vector.load %arg6[%c0_25, %c0_26] : memref<1x128xf32, #tpu.memory_space<vmem>>, vector<1x128xf32>
      %44 = vector.broadcast %43 : vector<1x128xf32> to vector<8x128xf32>
      %45 = arith.addf %42, %44 : vector<8x128xf32>
      %c0_27 = arith.constant 0 : index
      %c0_28 = arith.constant 0 : index
      %46 = vector.load %arg7[%c0_27, %c0_28] : memref<8x128xf32, #tpu.memory_space<vmem>>, vector<8x128xf32>
      tpu.vector_store %arg7[%c0_27, %c0_28], %45 {strides = array<i32>} : memref<8x128xf32, #tpu.memory_space<vmem>>, vector<8x128xf32>,
    } else {
    }
    return
  }
  func.func @transform_0(%arg0: i32) -> (i32, i32) {
    %c0_i32 = arith.constant 0 : i32
    %c0_i32_0 = arith.constant 0 : i32
    %c0_i32_1 = arith.constant 0 : i32
    return %c0_i32, %c0_i32_0 : i32, i32
  }
  func.func @transform_1(%arg0: i32) -> (i32, i32) {
    %c0_i32 = arith.constant 0 : i32
    %c0_i32_0 = arith.constant 0 : i32
    return %c0_i32, %arg0 : i32, i32
  }
  func.func @transform_2(%arg0: i32) -> (i32, i32) {
    %c0_i32 = arith.constant 0 : i32
    %c0_i32_0 = arith.constant 0 : i32
    return %c0_i32, %arg0 : i32, i32
  }
  func.func @transform_3(%arg0: i32) -> (i32, i32) {
    %c0_i32 = arith.constant 0 : i32
    %c0_i32_0 = arith.constant 0 : i32
    return %c0_i32, %arg0 : i32, i32
  }
  func.func @transform_4(%arg0: i32) -> (i32, i32) {
    %c0_i32 = arith.constant 0 : i32
    %c0_i32_0 = arith.constant 0 : i32
    return %arg0, %c0_i32 : i32, i32
  }
  func.func @transform_5(%arg0: i32) -> (i32, i32) {
    %c0_i32 = arith.constant 0 : i32
    %c0_i32_0 = arith.constant 0 : i32
    %c0_i32_1 = arith.constant 0 : i32
    return %c0_i32, %c0_i32_0 : i32, i32
  }
  func.func @transform_6(%arg0: i32) -> (i32, i32) {
    %c0_i32 = arith.constant 0 : i32
    %c0_i32_0 = arith.constant 0 : i32
    %c0_i32_1 = arith.constant 0 : i32
    return %c0_i32, %c0_i32_0 : i32, i32
  }
}

</mosaic_0001>

<llo_original>
// kernel: tpu_custom_call.1
$region0: #{tpu_custom_call.1}
  #allocation0 [shape = 'u32[]', space=smem, size = 0x4, offset = 0x4, fixed_abs, tag = 'smem constant byte address 0x4 - core index']
  #allocation1 [shape = 'u32[144,128]{1,0:T(1,128)}', space=vmem, size = 0x12000, scoped, tag = 'internal scratch']
  #allocation2 [shape = 'f32[8,128]{1,0:T(8,128)}', space=vmem, size = 0x1000, scoped, tag = 'scratch operand']
  %s0 = inlined_call_operand.hbm [shape: bf16[8,32], index: 0, kind: input, shape index: {}]
  %s1 = inlined_call_operand.hbm [shape: bf16[32,256], index: 1, kind: input, shape index: {}]
  %s2 = inlined_call_operand.vmem [shape: f32[1,256], index: 2, kind: input, shape index: {}]
  %s3 = inlined_call_operand.vmem [shape: f32[1,256], index: 3, kind: input, shape index: {}]
  %s4 = inlined_call_operand.hbm [shape: bf16[256,128], index: 4, kind: input, shape index: {}]
  %s5 = inlined_call_operand.vmem [shape: f32[1,128], index: 5, kind: input, shape index: {}]
  %s6 = inlined_call_operand.hbm [shape: f32[8,128], index: 6, kind: output, shape index: {}]
  %s7 = sld [smem:[#allocation0]]
  $region77: #{tpu_custom_call.1} parent=0
    _
  %s9 = ssub.s32 1, %s7
  %s10 = scalar_select 0, %s9, %s7
  $region1: #{tpu_custom_call.1} parent=0
    #allocation3 [shape = 'u8[2048]{0}', space=vmem, size = 0x800, scoped, tag = 'input window, operand 0, single buffered']
    #allocation4 [shape = 's32[2]{0}', space=sflag, size = 0x8, scoped, tag = 'scoped memory for tpu_custom_call.1']
    #allocation5 [shape = 's32[2]{0}', space=sflag, size = 0x8, scoped, tag = 'scoped memory for tpu_custom_call.1']
    #allocation6 [shape = 'u8[16384]{0}', space=vmem, size = 0x4000, scoped, tag = 'input window, operand 1']
    #allocation7 [shape = 's32[2]{0}', space=sflag, size = 0x8, scoped, tag = 'scoped memory for tpu_custom_call.1']
    #allocation8 [shape = 'u8[65536]{0}', space=vmem, size = 0x10000, scoped, tag = 'input window, operand 4']
    #allocation9 [shape = 'u8[4096]{0}', space=vmem, size = 0x1000, scoped, tag = 'output window, operand 0, single buffered']
    %11 = vsyncpa [#allocation4], 0
    %12 = vsyncpa [#allocation7], 0
    %s13 = scalar_lea.sflag [#allocation7], 1
    %14 = vsyncpa %s13, 0
    %15 = vsyncpa [#allocation5], 0
    loop: start=0, step=1, limit=4
    $region2: #{tpu_custom_call.1} parent=1 // loop_pre_header
      _
    $region3: #{tpu_custom_call.1} parent=1 // loop_header
      %s17 = sphi 0, %s21
      %p18 = scmp.ge.s32.totalorder %s17, 4
      %s25 = sphi 0, %s25
      %s27 = sphi 0, %s25
      %s28 = sphi 0, %s27
      %s42 = sphi 0, %s28
      %s48 = sphi 0, %s50
      %s51 = sphi 0, %s48
      %s52 = sphi 0, %s51
      %s68 = sphi 0, %s52
      %s74 = sphi 0, %s76
      %s77 = sphi 0, %s74
      %s78 = sphi 0, %s77
      %s94 = sphi 0, %s78
      %s100 = sphi 0, %s102
      %s103 = sphi 0, %s100
      %s104 = sphi 0, %s103
      %s120 = sphi 0, %s104
      %s126 = sphi 0, %s128
      %s129 = sphi 0, %s126
      %s130 = sphi 0, %s129
      %s146 = sphi 0, %s130
      %s150 = sphi 0, %s150
      %s152 = sphi 0, %s150
      %s153 = sphi 0, %s152
      %s167 = sphi 0, %s153
      %s171 = sphi 0, %s171
      %s173 = sphi 0, %s171
      %s174 = sphi 0, %s173
      %s188 = sphi 0, %s174
    $region4: #{tpu_custom_call.1} parent=1 // loop_header_branch
      %20 = sbr.rel (%p18) target = $region8
    $region5: #{tpu_custom_call.1} parent=1 // loop_body
      %s22 = ssub.s32 %s17, 1
      %s23 = ssub.s32 %s17, 2
      %s24 = sadd.s32 %s17, 1
      %s26 = sadd.s32 %s25, 1
      %p29 = scmp.eq.s32.totalorder %s17, 1
      %p30 = scmp.ne.s32.totalorder %s25, %s27
      %p31 = scmp.eq.s32.totalorder %s17, 0
      %p32 = por %p30, %p31
      %p33 = scmp.ne.s32.totalorder %s25, %s27
      %p34 = scmp.eq.s32.totalorder %s22, 1
      %p35 = por %p33, %p34
      %p36 = scmp.ne.s32.totalorder %s27, %s28
      %p37 = scmp.eq.s32.totalorder %s22, 0
      %p38 = por %p36, %p37
      %p39 = scmp.ne.s32.totalorder %s27, %s28
      %p40 = scmp.eq.s32.totalorder %s23, 1
      %p41 = por %p39, %p40
      %p43 = scmp.ne.s32.totalorder %s28, %s42
      %p44 = scmp.eq.s32.totalorder %s23, 0
      %p45 = por %p43, %p44
      %s46 = ssub.s32 %s17, %s24
      %p47 = scmp.eq.s32.totalorder %s46, 0
      %s49 = sadd.s32 %s48, 1
      %s50 = scalar_select %p47, %s48, %s49
      %p53 = pneg %p47
      %p54 = scmp.eq.s32.totalorder %s17, 1
      %p55 = por %p53, %p54
      %p56 = scmp.ne.s32.totalorder %s48, %s51
      %p57 = scmp.eq.s32.totalorder %s17, 0
      %p58 = por %p56, %p57
      %p59 = scmp.ne.s32.totalorder %s48, %s51
      %p60 = scmp.eq.s32.totalorder %s22, 1
      %p61 = por %p59, %p60
      %p62 = scmp.ne.s32.totalorder %s51, %s52
      %p63 = scmp.eq.s32.totalorder %s22, 0
      %p64 = por %p62, %p63
      %p65 = scmp.ne.s32.totalorder %s51, %s52
      %p66 = scmp.eq.s32.totalorder %s23, 1
      %p67 = por %p65, %p66
      %p69 = scmp.ne.s32.totalorder %s52, %s68
      %p70 = scmp.eq.s32.totalorder %s23, 0
      %p71 = por %p69, %p70
      %s72 = ssub.s32 %s17, %s24
      %p73 = scmp.eq.s32.totalorder %s72, 0
      %s75 = sadd.s32 %s74, 1
      %s76 = scalar_select %p73, %s74, %s75
      %p79 = pneg %p73
      %p80 = scmp.eq.s32.totalorder %s17, 1
      %p81 = por %p79, %p80
      %p82 = scmp.ne.s32.totalorder %s74, %s77
      %p83 = scmp.eq.s32.totalorder %s17, 0
      %p84 = por %p82, %p83
      %p85 = scmp.ne.s32.totalorder %s74, %s77
      %p86 = scmp.eq.s32.totalorder %s22, 1
      %p87 = por %p85, %p86
      %p88 = scmp.ne.s32.totalorder %s77, %s78
      %p89 = scmp.eq.s32.totalorder %s22, 0
      %p90 = por %p88, %p89
      %p91 = scmp.ne.s32.totalorder %s77, %s78
      %p92 = scmp.eq.s32.totalorder %s23, 1
      %p93 = por %p91, %p92
      %p95 = scmp.ne.s32.totalorder %s78, %s94
      %p96 = scmp.eq.s32.totalorder %s23, 0
      %p97 = por %p95, %p96
      %s98 = ssub.s32 %s17, %s24
      %p99 = scmp.eq.s32.totalorder %s98, 0
      %s101 = sadd.s32 %s100, 1
      %s102 = scalar_select %p99, %s100, %s101
      %p105 = pneg %p99
      %p106 = scmp.eq.s32.totalorder %s17, 1
      %p107 = por %p105, %p106
      %p108 = scmp.ne.s32.totalorder %s100, %s103
      %p109 = scmp.eq.s32.totalorder %s17, 0
      %p110 = por %p108, %p109
      %p111 = scmp.ne.s32.totalorder %s100, %s103
      %p112 = scmp.eq.s32.totalorder %s22, 1
      %p113 = por %p111, %p112
      %p114 = scmp.ne.s32.totalorder %s103, %s104
      %p115 = scmp.eq.s32.totalorder %s22, 0
      %p116 = por %p114, %p115
      %p117 = scmp.ne.s32.totalorder %s103, %s104
      %p118 = scmp.eq.s32.totalorder %s23, 1
      %p119 = por %p117, %p118
      %p121 = scmp.ne.s32.totalorder %s104, %s120
      %p122 = scmp.eq.s32.totalorder %s23, 0
      %p123 = por %p121, %p122
      %s124 = ssub.s32 %s17, %s24
      %p125 = scmp.eq.s32.totalorder %s124, 0
      %s127 = sadd.s32 %s126, 1
      %s128 = scalar_select %p125, %s126, %s127
      %p131 = pneg %p125
      %p132 = scmp.eq.s32.totalorder %s17, 1
      %p133 = por %p131, %p132
      %p134 = scmp.ne.s32.totalorder %s126, %s129
      %p135 = scmp.eq.s32.totalorder %s17, 0
      %p136 = por %p134, %p135
      %p137 = scmp.ne.s32.totalorder %s126, %s129
      %p138 = scmp.eq.s32.totalorder %s22, 1
      %p139 = por %p137, %p138
      %p140 = scmp.ne.s32.totalorder %s129, %s130
      %p141 = scmp.eq.s32.totalorder %s22, 0
      %p142 = por %p140, %p141
      %p143 = scmp.ne.s32.totalorder %s129, %s130
      %p144 = scmp.eq.s32.totalorder %s23, 1
      %p145 = por %p143, %p144
      %p147 = scmp.ne.s32.totalorder %s130, %s146
      %p148 = scmp.eq.s32.totalorder %s23, 0
      %p149 = por %p147, %p148
      %s151 = sadd.s32 %s150, 1
      %p154 = scmp.eq.s32.totalorder %s17, 1
      %p155 = scmp.ne.s32.totalorder %s150, %s152
      %p156 = scmp.eq.s32.totalorder %s17, 0
      %p157 = por %p155, %p156
      %p158 = scmp.ne.s32.totalorder %s150, %s152
      %p159 = scmp.eq.s32.totalorder %s22, 1
      %p160 = por %p158, %p159
      %p161 = scmp.ne.s32.totalorder %s152, %s153
      %p162 = scmp.eq.s32.totalorder %s22, 0
      %p163 = por %p161, %p162
      %p164 = scmp.ne.s32.totalorder %s152, %s153
      %p165 = scmp.eq.s32.totalorder %s23, 1
      %p166 = por %p164, %p165
      %p168 = scmp.ne.s32.totalorder %s153, %s167
      %p169 = scmp.eq.s32.totalorder %s23, 0
      %p170 = por %p168, %p169
      %s172 = sadd.s32 %s171, 1
      %p175 = scmp.eq.s32.totalorder %s17, 1
      %p176 = scmp.ne.s32.totalorder %s171, %s173
      %p177 = scmp.eq.s32.totalorder %s17, 0
      %p178 = por %p176, %p177
      %p179 = scmp.ne.s32.totalorder %s171, %s173
      %p180 = scmp.eq.s32.totalorder %s22, 1
      %p181 = por %p179, %p180
      %p182 = scmp.ne.s32.totalorder %s173, %s174
      %p183 = scmp.eq.s32.totalorder %s22, 0
      %p184 = por %p182, %p183
      %p185 = scmp.ne.s32.totalorder %s173, %s174
      %p186 = scmp.eq.s32.totalorder %s23, 1
      %p187 = por %p185, %p186
      %p189 = scmp.ne.s32.totalorder %s174, %s188
      %p190 = scmp.eq.s32.totalorder %s23, 0
      %p191 = por %p189, %p190
      %p192 = scmp.le.s32.totalorder 1, %s17
      %p193 = scmp.lt.s32.totalorder %s17, 3
      %p194 = pnand %p192, %p193
      %p195 = pneg %p194
      // Predicated region
      $region9: #{tpu_custom_call.1} parent=5 // pred_check
        _
      $region10: #{tpu_custom_call.1} parent=5 // pred_check_branch
        %197 = sbr.rel (%p194) target = $region12
      $region11: #{tpu_custom_call.1} parent=5 // pred_region
        %s198 = ssub.s32 %s17, 1
        // Predicated region
        $region13: #{tpu_custom_call.1} parent=11 // pred_check
          %p199 = pneg %p38
        $region14: #{tpu_custom_call.1} parent=11 // pred_check_branch
          %201 = sbr.rel (%p199) target = $region16
        $region15: #{tpu_custom_call.1} parent=11 // pred_region
          %s203 = ssub.s32 64, 64
          %204 = vsyncadd [#allocation4], %s203
          %s206 = sshll.u32 [#allocation3], 4
          %s207 = int_to_ptr.vmem [resolvable:$true] %s206
          %209 = dma.hbm_to_vmem [thread:$0]  %s0, 64, %s207, [#allocation4]
        $region16: #{tpu_custom_call.1} parent=11 // pred_fallthru
          _
        // Predicated region
        $region17: #{tpu_custom_call.1} parent=11 // pred_check
          %p210 = pneg %p163
        $region18: #{tpu_custom_call.1} parent=11 // pred_check_branch
          %212 = sbr.rel (%p210) target = $region20
        $region19: #{tpu_custom_call.1} parent=11 // pred_region
          _
        $region20: #{tpu_custom_call.1} parent=11 // pred_fallthru
          _
      $region12: #{tpu_custom_call.1} parent=5 // pred_fallthru
        _
      %p213 = scmp.lt.s32.totalorder %s17, 2
      // Predicated region
      $region21: #{tpu_custom_call.1} parent=5 // pred_check
        %p214 = pneg %p213
      $region22: #{tpu_custom_call.1} parent=5 // pred_check_branch
        %216 = sbr.rel (%p214) target = $region24
      $region23: #{tpu_custom_call.1} parent=5 // pred_region
        // Predicated region
        $region25: #{tpu_custom_call.1} parent=23 // pred_check
          %p217 = pneg %p58
        $region26: #{tpu_custom_call.1} parent=23 // pred_check_branch
          %219 = sbr.rel (%p217) target = $region28
        $region27: #{tpu_custom_call.1} parent=23 // pred_region
          %s220 = sand.u32 %s17, 1
          %s221 = scalar_lea.sflag [#allocation7], %s220
          %s222 = sand.u32 %s48, 1
          %s223 = smul.addr %s222, 16
          %s224 = scalar_lea.vmem [#allocation6], %s223
          %s226 = ssub.s32 256, 256
          %227 = vsyncadd %s221, %s226
          %s228 = smul.addr %s17, 64
          %s229 = scalar_lea.hbm %s1, %s228
          %s230 = sshll.u32 %s224, 4
          %s231 = int_to_ptr.vmem [resolvable:$true] %s230
          %236 = dma.hbm_to_vmem [thread:$0]  %s229, 256, %s231, %s221, 128, 64, 4
        $region28: #{tpu_custom_call.1} parent=23 // pred_fallthru
          _
        // Predicated region
        $region29: #{tpu_custom_call.1} parent=23 // pred_check
          %p237 = pneg %p84
        $region30: #{tpu_custom_call.1} parent=23 // pred_check_branch
          %239 = sbr.rel (%p237) target = $region32
        $region31: #{tpu_custom_call.1} parent=23 // pred_region
          %p240 = scmp.lt.s32.totalorder %s17, 1
          %s241 = scalar_select %p240, %s17, 1
          %s242 = scalar_lea.vmem %s2, %s241
        $region32: #{tpu_custom_call.1} parent=23 // pred_fallthru
          _
        // Predicated region
        $region33: #{tpu_custom_call.1} parent=23 // pred_check
          %p243 = pneg %p110
        $region34: #{tpu_custom_call.1} parent=23 // pred_check_branch
          %245 = sbr.rel (%p243) target = $region36
        $region35: #{tpu_custom_call.1} parent=23 // pred_region
          %p246 = scmp.lt.s32.totalorder %s17, 1
          %s247 = scalar_select %p246, %s17, 1
          %s248 = scalar_lea.vmem %s3, %s247
        $region36: #{tpu_custom_call.1} parent=23 // pred_fallthru
          _
        // Predicated region
        $region37: #{tpu_custom_call.1} parent=23 // pred_check
          %p249 = pneg %p136
        $region38: #{tpu_custom_call.1} parent=23 // pred_check_branch
          %251 = sbr.rel (%p249) target = $region40
        $region39: #{tpu_custom_call.1} parent=23 // pred_region
          %s252 = sand.u32 %s17, 1
          %s253 = scalar_lea.sflag [#allocation7], %s252
          %s254 = sand.u32 %s126, 1
          %s255 = smul.addr %s254, 64
          %s256 = scalar_lea.vmem [#allocation8], %s255
          %s257 = smul.u32 16, %s17
          %s259 = ssub.s32 1024, 1024
          %260 = vsyncadd %s253, %s259
          %s261 = smul.addr %s257, 64
          %s262 = scalar_lea.hbm %s4, %s261
          %s263 = sshll.u32 %s256, 4
          %s264 = int_to_ptr.vmem [resolvable:$true] %s263
          %269 = dma.hbm_to_vmem [thread:$0]  %s262, 1024, %s264, %s253, 64, 64, 4
        $region40: #{tpu_custom_call.1} parent=23 // pred_fallthru
          _
      $region24: #{tpu_custom_call.1} parent=5 // pred_fallthru
        _
      %p270 = scmp.le.s32.totalorder 1, %s17
      %p271 = scmp.lt.s32.totalorder %s17, 3
      %p272 = pnand %p270, %p271
      %p273 = pneg %p272
      // Predicated region
      $region41: #{tpu_custom_call.1} parent=5 // pred_check
        _
      $region42: #{tpu_custom_call.1} parent=5 // pred_check_branch
        %275 = sbr.rel (%p272) target = $region44
      $region43: #{tpu_custom_call.1} parent=5 // pred_region
        %s276 = ssub.s32 %s17, 1
        // Predicated region
        $region45: #{tpu_custom_call.1} parent=43 // pred_check
          %p277 = pneg %p38
        $region46: #{tpu_custom_call.1} parent=43 // pred_check_branch
          %279 = sbr.rel (%p277) target = $region48
        $region47: #{tpu_custom_call.1} parent=43 // pred_region
          %280 = dma.done [#allocation4], 64
        $region48: #{tpu_custom_call.1} parent=43 // pred_fallthru
          _
        %s281 = sand.u32 %s22, 1
        %s282 = scalar_lea.sflag [#allocation7], %s281
        %s283 = sand.u32 %s51, 1
        %s284 = smul.addr %s283, 16
        %s285 = scalar_lea.vmem [#allocation6], %s284
        // Predicated region
        $region49: #{tpu_custom_call.1} parent=43 // pred_check
          %p286 = pneg %p64
        $region50: #{tpu_custom_call.1} parent=43 // pred_check_branch
          %288 = sbr.rel (%p286) target = $region52
        $region51: #{tpu_custom_call.1} parent=43 // pred_region
          %289 = dma.done %s282, 256
        $region52: #{tpu_custom_call.1} parent=43 // pred_fallthru
          _
        %s290 = sand.u32 %s22, 1
        %s291 = scalar_lea.sflag [#allocation7], %s290
        %s292 = sand.u32 %s129, 1
        %s293 = smul.addr %s292, 64
        %s294 = scalar_lea.vmem [#allocation8], %s293
        // Predicated region
        $region53: #{tpu_custom_call.1} parent=43 // pred_check
          %p295 = pneg %p142
        $region54: #{tpu_custom_call.1} parent=43 // pred_check_branch
          %297 = sbr.rel (%p295) target = $region56
        $region55: #{tpu_custom_call.1} parent=43 // pred_region
          %298 = dma.done %s291, 1024
        $region56: #{tpu_custom_call.1} parent=43 // pred_fallthru
          _
        %p299 = pneg %p38
        %p300 = pneg %p35
        %s301 = sand.u32 %s22, 1
        %s302 = scalar_lea.sflag [#allocation7], %s301
        %s303 = sand.u32 %s51, 1
        %s304 = smul.addr %s303, 16
        %s305 = scalar_lea.vmem [#allocation6], %s304
        %p306 = pneg %p64
        %p307 = pneg %p61
        %p308 = scmp.lt.s32.totalorder %s22, 1
        %s309 = scalar_select %p308, %s22, 1
        %s310 = scalar_lea.vmem %s2, %s309
        %p311 = pneg %p90
        %p312 = pneg %p87
        %p313 = scmp.lt.s32.totalorder %s22, 1
        %s314 = scalar_select %p313, %s22, 1
        %s315 = scalar_lea.vmem %s3, %s314
        %p316 = pneg %p116
        %p317 = pneg %p113
        %s318 = sand.u32 %s22, 1
        %s319 = scalar_lea.sflag [#allocation7], %s318
        %s320 = sand.u32 %s129, 1
        %s321 = smul.addr %s320, 64
        %s322 = scalar_lea.vmem [#allocation8], %s321
        %p323 = pneg %p142
        %p324 = pneg %p139
        %p325 = pneg %p163
        %p326 = pneg %p160
        %p327 = pneg %p184
        %p328 = pneg %p181
        %p329 = scmp.lt.s32.totalorder %s22, 1
        %s330 = scalar_select %p329, %s22, 1
        %s331 = scalar_lea.vmem %s2, %s330
        %p332 = scmp.lt.s32.totalorder %s22, 1
        %s333 = scalar_select %p332, %s22, 1
        %s334 = scalar_lea.vmem %s3, %s333
        %s335 = smul.u32 16, %s22
        %p337 = scmp.eq.s32.totalorder %s22, 0
        // Predicated region
        $region57: #{tpu_custom_call.1} parent=43 // pred_check
          %p338 = pneg %p337
        $region58: #{tpu_custom_call.1} parent=43 // pred_check_branch
          %340 = sbr.rel (%p338) target = $region60
        $region59: #{tpu_custom_call.1} parent=43 // pred_region
          %341 = vst [vmem:[#allocation2] sm:$0xff] 0.0
        $region60: #{tpu_custom_call.1} parent=43 // pred_fallthru
          _
        %v342 = vld [vmem:[#allocation3] sm:$0xf]
        %v343 = vld [vmem:[%s285] sm:$0xf]
        %v344 = vld [vmem:[%s285 + $0x4] sm:$0xf]
        %v345 = vld [vmem:[%s285 + $0x8] sm:$0xf]
        %v346 = vld [vmem:[%s285 + $0xc] sm:$0xf]
        %v351 = vunpack.c.l.b16 %v343
        %v352 = vunpack.c.l.b16 %v344
        %v353 = vunpack.c.l.b16 %v345
        %v354 = vunpack.c.l.b16 %v346
        %v355 = vpack.c.b16 %v352, %v351
        %v356 = vpack.c.b16 %v354, %v353
        %vm359 = vcmask 261120
        %v361 = vsel %vm359, %v342, 0
        %363 = vmatprep.subr.bf16.mxu0 0
        %364 = vmatpush1.bf16.msra.mxu0 0
        %365 = vmatprep.subr.bf16.mxu0 0
        %366 = vmatpush1.bf16.msra.mxu0 0
        %367 = vmatprep.subr.bf16.mxu0 0
        %368 = vmatpush1.bf16.msra.mxu0 0
        %369 = vmatprep.subr.bf16.mxu0 0
        %370 = vmatpush1.bf16.msra.mxu0 0
        %371 = vmatprep.subr.bf16.mxu0 0
        %372 = vmatpush1.bf16.msra.mxu0 0
        %373 = vmatprep.subr.bf16.mxu0 0
        %374 = vmatpush1.bf16.msra.mxu0 0
        %375 = vmatprep.subr.bf16.mxu0 0
        %376 = vmatpush1.bf16.msra.mxu0 %v356
        %377 = vmatprep.subr.bf16.mxu0 0
        %378 = vmatpush1.bf16.msra.mxu0 %v355
        %379 = vmatprep.subr.bf16.mxu0 0
        %380 = vmatpush2.bf16.msra.mxu0 0
        %381 = vmatprep.subr.bf16.mxu0 0
        %382 = vmatpush2.bf16.msra.mxu0 0
        %383 = vmatprep.subr.bf16.mxu0 0
        %384 = vmatpush2.bf16.msra.mxu0 0
        %385 = vmatprep.subr.bf16.mxu0 0
        %386 = vmatpush2.bf16.msra.mxu0 0
        %387 = vmatprep.subr.bf16.mxu0 0
        %388 = vmatpush2.bf16.msra.mxu0 0
        %389 = vmatprep.subr.bf16.mxu0 0
        %390 = vmatpush2.bf16.msra.mxu0 0
        %391 = vmatprep.subr.bf16.mxu0 0
        %392 = vmatpush2.bf16.msra.mxu0 0
        %393 = vmatprep.subr.bf16.mxu0 0
        %394 = vmatpush2.bf16.msra.mxu0 0
        %395 = vmatprep.mubr.bf16.mxu0 0
        %396 = vmatmul.mubr.bf16.gmra.mxu0 %v361
        %v397 = vpop.f32.mrf.mxu0
        %v398 = vadd.f32 0.0, %v397
        %v399 = vpop.f32.mrf.mxu0
        %v400 = vpop.f32.mrf.mxu0
        %v401 = vpop.f32.mrf.mxu0
        %402 = vdwg.mxu0
        %v403 = vrot.slane %v398, 4
        %v404 = vadd.f32 %v398, %v403
        %v405 = vrot.slane %v404, 2
        %v406 = vadd.f32 %v404, %v405
        %v407 = vrot.slane %v406, 1
        %v408 = vadd.f32 %v406, %v407
        %v409 = vmul.f32 %v408, 0.125
        %v410 = vmul.f32 %v398, %v398
        %v411 = vrot.slane %v410, 4
        %v412 = vadd.f32 %v410, %v411
        %v413 = vrot.slane %v412, 2
        %v414 = vadd.f32 %v412, %v413
        %v415 = vrot.slane %v414, 1
        %v416 = vadd.f32 %v414, %v415
        %v417 = vmul.f32 %v416, 0.125
        %v418 = vmul.f32 %v409, %v409
        %v419 = vsub.f32 %v417, %v418
        %v420 = vmax.f32 %v419, 0.0
        %v421 = vld [vmem:[%s331] sm:$0x1]
        %v422 = vadd.f32 %v420, 1e-05
        %v423 = vrsqrt.pop %v422
        %v424 = vmul.f32 %v421, %v423
        %v425 = vld [vmem:[%s334] sm:$0x1]
        %v426 = vmul.f32 %v409, %v424
        %v427 = vsub.f32 %v425, %v426
        %v429 = vlaneseq
        %v430 = vshrl.u32 %v429, 7
        %v431 = vsub.s32 0, %v430
        %v432 = vrot.slane %v424, %v431
        %v434 = vmul.f32 %v398, %v432
        %v436 = vlaneseq
        %v437 = vshrl.u32 %v436, 7
        %v438 = vsub.s32 0, %v437
        %v439 = vrot.slane %v427, %v438
        %v441 = vadd.f32 %v434, %v439
        %v442 = vmax.f32 %v441, 0.0
        %v443 = vld [vmem:[#allocation2] sm:$0xff]
        %v444 = vpack.c.bf16 %v442, %v442
        %v445 = vld [vmem:[%s294] sm:$0xf]
        %v446 = vld [vmem:[%s294 + $0x4] sm:$0xf]
        %v447 = vld [vmem:[%s294 + $0x8] sm:$0xf]
        %v448 = vld [vmem:[%s294 + $0xc] sm:$0xf]
        %v449 = vld [vmem:[%s294 + $0x10] sm:$0xf]
        %v450 = vld [vmem:[%s294 + $0x14] sm:$0xf]
        %v451 = vld [vmem:[%s294 + $0x18] sm:$0xf]
        %v452 = vld [vmem:[%s294 + $0x1c] sm:$0xf]
        %v453 = vld [vmem:[%s294 + $0x20] sm:$0xf]
        %v454 = vld [vmem:[%s294 + $0x24] sm:$0xf]
        %v455 = vld [vmem:[%s294 + $0x28] sm:$0xf]
        %v456 = vld [vmem:[%s294 + $0x2c] sm:$0xf]
        %v457 = vld [vmem:[%s294 + $0x30] sm:$0xf]
        %v458 = vld [vmem:[%s294 + $0x34] sm:$0xf]
        %v459 = vld [vmem:[%s294 + $0x38] sm:$0xf]
        %v460 = vld [vmem:[%s294 + $0x3c] sm:$0xf]
        %v477 = vunpack.c.l.b16 %v445
        %v478 = vunpack.c.l.b16 %v446
        %v479 = vunpack.c.l.b16 %v447
        %v480 = vunpack.c.l.b16 %v448
        %v481 = vunpack.c.l.b16 %v449
        %v482 = vunpack.c.l.b16 %v450
        %v483 = vunpack.c.l.b16 %v451
        %v484 = vunpack.c.l.b16 %v452
        %v485 = vunpack.c.l.b16 %v453
        %v486 = vunpack.c.l.b16 %v454
        %v487 = vunpack.c.l.b16 %v455
        %v488 = vunpack.c.l.b16 %v456
        %v489 = vunpack.c.l.b16 %v457
        %v490 = vunpack.c.l.b16 %v458
        %v491 = vunpack.c.l.b16 %v459
        %v492 = vunpack.c.l.b16 %v460
        %v493 = vpack.c.b16 %v478, %v477
        %v494 = vpack.c.b16 %v480, %v479
        %v495 = vpack.c.b16 %v482, %v481
        %v496 = vpack.c.b16 %v484, %v483
        %v497 = vpack.c.b16 %v486, %v485
        %v498 = vpack.c.b16 %v488, %v487
        %v499 = vpack.c.b16 %v490, %v489
        %v500 = vpack.c.b16 %v492, %v491
        %509 = vmatprep.subr.bf16.mxu0 0
        %510 = vmatpush1.bf16.msra.mxu0 %v500
        %511 = vmatprep.subr.bf16.mxu0 0
        %512 = vmatpush1.bf16.msra.mxu0 %v499
        %513 = vmatprep.subr.bf16.mxu0 0
        %514 = vmatpush1.bf16.msra.mxu0 %v498
        %515 = vmatprep.subr.bf16.mxu0 0
        %516 = vmatpush1.bf16.msra.mxu0 %v497
        %517 = vmatprep.subr.bf16.mxu0 0
        %518 = vmatpush1.bf16.msra.mxu0 %v496
        %519 = vmatprep.subr.bf16.mxu0 0
        %520 = vmatpush1.bf16.msra.mxu0 %v495
        %521 = vmatprep.subr.bf16.mxu0 0
        %522 = vmatpush1.bf16.msra.mxu0 %v494
        %523 = vmatprep.subr.bf16.mxu0 0
        %524 = vmatpush1.bf16.msra.mxu0 %v493
        %525 = vmatprep.subr.bf16.mxu0 0
        %526 = vmatpush2.bf16.msra.mxu0 0
        %527 = vmatprep.subr.bf16.mxu0 0
        %528 = vmatpush2.bf16.msra.mxu0 0
        %529 = vmatprep.subr.bf16.mxu0 0
        %530 = vmatpush2.bf16.msra.mxu0 0
        %531 = vmatprep.subr.bf16.mxu0 0
        %532 = vmatpush2.bf16.msra.mxu0 0
        %533 = vmatprep.subr.bf16.mxu0 0
        %534 = vmatpush2.bf16.msra.mxu0 0
        %535 = vmatprep.subr.bf16.mxu0 0
        %536 = vmatpush2.bf16.msra.mxu0 0
        %537 = vmatprep.subr.bf16.mxu0 0
        %538 = vmatpush2.bf16.msra.mxu0 0
        %539 = vmatprep.subr.bf16.mxu0 0
        %540 = vmatpush2.bf16.msra.mxu0 0
        %541 = vmatprep.mubr.bf16.mxu0 0
        %542 = vmatmul.mubr.bf16.gmra.mxu0 %v444
        %v543 = vpop.f32.mrf.mxu0
        %v544 = vadd.f32 0.0, %v543
        %v545 = vpop.f32.mrf.mxu0
        %v546 = vpop.f32.mrf.mxu0
        %v547 = vpop.f32.mrf.mxu0
        %548 = vdwg.mxu0
        %v549 = vadd.f32 %v443, %v544
        %550 = vst [vmem:[#allocation2] sm:$0xff] %v549
        %p551 = scmp.eq.s32.totalorder %s22, 1
        // Predicated region
        $region61: #{tpu_custom_call.1} parent=43 // pred_check
          %p552 = pneg %p551
        $region62: #{tpu_custom_call.1} parent=43 // pred_check_branch
          %554 = sbr.rel (%p552) target = $region64
        $region63: #{tpu_custom_call.1} parent=43 // pred_region
          %v555 = vld [vmem:[#allocation2] sm:$0xff]
          %v556 = vld [vmem:[%s5] sm:$0x1]
          %v558 = vlaneseq
          %v559 = vshrl.u32 %v558, 7
          %v560 = vsub.s32 0, %v559
          %v561 = vrot.slane %v556, %v560
          %v563 = vadd.f32 %v555, %v561
          %564 = vst [vmem:[#allocation9] sm:$0xff] %v563
        $region64: #{tpu_custom_call.1} parent=43 // pred_fallthru
          _
        // Predicated region
        $region65: #{tpu_custom_call.1} parent=43 // pred_check
          %p565 = pneg %p181
        $region66: #{tpu_custom_call.1} parent=43 // pred_check_branch
          %567 = sbr.rel (%p565) target = $region68
        $region67: #{tpu_custom_call.1} parent=43 // pred_region
          %s569 = ssub.s32 128, 128
          %570 = vsyncadd [#allocation5], %s569
          %s572 = sshll.u32 [#allocation9], 4
          %s573 = int_to_ptr.vmem [resolvable:$true] %s572
          %575 = dma.vmem_to_hbm [thread:$0]  %s573, 128, %s6, [#allocation5]
        $region68: #{tpu_custom_call.1} parent=43 // pred_fallthru
          _
        // Predicated region
        $region69: #{tpu_custom_call.1} parent=43 // pred_check
          %p576 = pneg %p181
        $region70: #{tpu_custom_call.1} parent=43 // pred_check_branch
          %578 = sbr.rel (%p576) target = $region72
        $region71: #{tpu_custom_call.1} parent=43 // pred_region
          %579 = dma.done [#allocation5], 128
        $region72: #{tpu_custom_call.1} parent=43 // pred_fallthru
          _
      $region44: #{tpu_custom_call.1} parent=5 // pred_fallthru
        _
      %p580 = scmp.le.s32.totalorder 2, %s17
      // Predicated region
      $region73: #{tpu_custom_call.1} parent=5 // pred_check
        %p581 = pneg %p580
      $region74: #{tpu_custom_call.1} parent=5 // pred_check_branch
        %583 = sbr.rel (%p581) target = $region76
      $region75: #{tpu_custom_call.1} parent=5 // pred_region
        %s584 = ssub.s32 %s17, 2
      $region76: #{tpu_custom_call.1} parent=5 // pred_fallthru
        _
    $region6: #{tpu_custom_call.1} parent=1 // loop_footer
      %s21 = sadd.s32 1, %s17
    $region7: #{tpu_custom_call.1} parent=1 // loop_footer_branch
      %16 = sbr.rel target = $region3
    $region8: #{tpu_custom_call.1} parent=1 // loop_exit
      _
    %585 = vsyncpa [#allocation4], 1
    %s586 = scalar_lea.sflag [#allocation4], 1
    %587 = vsyncpa %s586, 1
    %588 = vsyncpa [#allocation7], 1
    %s589 = scalar_lea.sflag [#allocation7], 1
    %590 = vsyncpa %s589, 1
    %591 = vsyncpa [#allocation5], 1
    %s592 = scalar_lea.sflag [#allocation5], 1
    %593 = vsyncpa %s592, 1

</llo_original>
